<compile_context>
chip_gen: v5e
topology: v5e:2x2
jax: 0.10.0
libtpu: 0.0.40
codegen_flags: <defaults>
</compile_context>

<pallas_src>
import jax
import jax.numpy as jnp
from jax.experimental import pallas as pl
from jax.experimental.pallas import tpu as pltpu

_LANE = 128
_TARGET_BLOCK_BYTES = 2 * 1024 * 1024  # ~2 MiB per block per array


def _identity_copy_kernel(x_ref, o_ref):
    # Pure identity: the module simply returns x['X'].
    o_ref[...] = x_ref[...]


def _materialize_copy(sig: jax.Array, alias: bool) -> jax.Array:
    """Identity copy of `sig` through a lane-dense, large-tile Pallas kernel."""
    itemsize = jnp.dtype(sig.dtype).itemsize
    total = sig.size
    bytes_accessed = 2 * total * itemsize
    cost = pl.CostEstimate(flops=0, transcendentals=0,
                           bytes_accessed=bytes_accessed)
    io_alias = {0: 0} if alias else {}

    if total % _LANE != 0:
        # TODO(synk): element count not a multiple of 128 lanes; fall back to a
        # single whole-array VMEM block (fine for small inputs, not tiled).
        return pl.pallas_call(
            _identity_copy_kernel,
            out_shape=jax.ShapeDtypeStruct(sig.shape, sig.dtype),
            cost_estimate=cost,
            input_output_aliases=io_alias,
        )(sig)

    rows = total // _LANE
    flat2d = sig.reshape(rows, _LANE)

    # Sublane multiple required for a partial-extent block (8 for 4-byte,
    # 16 for 2-byte, 32 for 1-byte dtypes).
    sub = max(8, 32 // itemsize)

    if rows <= sub:
        # Full-extent block is always legal regardless of divisibility.
        block_rows = rows
    else:
        cap_rows = max(sub,
                       (_TARGET_BLOCK_BYTES // (_LANE * itemsize)) // sub * sub)
        block_rows = min(cap_rows, (rows // sub) * sub)

    n_steps = pl.cdiv(rows, block_rows)
    block_shape = (block_rows, _LANE)

    out2d = pl.pallas_call(
        _identity_copy_kernel,
        out_shape=jax.ShapeDtypeStruct((rows, _LANE), sig.dtype),
        grid_spec=pltpu.PrefetchScalarGridSpec(
            num_scalar_prefetch=0,
            grid=(n_steps,),
            in_specs=[pl.BlockSpec(block_shape, lambda i: (i, 0))],
            out_specs=pl.BlockSpec(block_shape, lambda i: (i, 0)),
        ),
        compiler_params=pltpu.CompilerParams(
            dimension_semantics=("parallel",),
        ),
        cost_estimate=cost,
        input_output_aliases=io_alias,
    )(flat2d)

    return out2d.reshape(sig.shape)


def extract_signal(x: dict, *, materialize: bool = False,
                   alias_output_to_input: bool = False) -> jax.Array:
    """JAX/Pallas equivalent of ExtractSignal.forward.

    Args:
        x: dict of arrays; must contain the key 'X'.
        materialize: if False (default), return x['X'] directly — this is the
            exact module semantics and costs zero HBM traffic. If True, run
            the optimized Pallas identity-copy kernel to produce a fresh
            buffer.
        alias_output_to_input: if True (and materialize), pass
            input_output_aliases={0: 0}; when the caller donates the input
            buffer under jit the copy becomes a no-op alias.

    Returns:
        The array stored under 'X' (same shape, same dtype).
    """
    sig = x["X"]
    if not materialize:
        # The op is a dict lookup — no kernel launch, no HBM round-trip.
        return sig
    return _materialize_copy(sig, alias_output_to_input)


if __name__ == "__main__":
    key = jax.random.PRNGKey(0)
    k_sig, k_other = jax.random.split(key)

    # Small shapes consistent with m6Anet-style inputs:
    # 'X' is the signal feature tensor, plus an unrelated entry to show the
    # dict-selection semantics.
    batch, seq, feat = 2, 8, 32
    x = {
        "X": jax.random.normal(k_sig, (batch, seq, feat), dtype=jnp.float32),
        "kmer": jax.random.randint(k_other, (batch, seq), 0, 16, dtype=jnp.int32),
    }

    # 1) Default (optimal) path: pure dict lookup, zero data movement.
    out_fast = jax.block_until_ready(extract_signal(x))
    assert out_fast.shape == x["X"].shape
    assert out_fast.dtype == x["X"].dtype
    assert bool(jnp.all(out_fast == x["X"]))

    # 2) Optional materializing path through the lane-dense Pallas copy kernel.
    out_copy = jax.block_until_ready(extract_signal(x, materialize=True))
    assert out_copy.shape == x["X"].shape
    assert out_copy.dtype == x["X"].dtype
    assert bool(jnp.all(out_copy == x["X"]))

    # 3) Aliased variant (pays off fully when the caller donates the buffer
    #    under jit; still correct when called eagerly).
    out_alias = jax.block_until_ready(
        extract_signal(x, materialize=True, alias_output_to_input=True))
    assert bool(jnp.all(out_alias == x["X"]))

    print("KERNEL_OK")
</pallas_src>

<mosaic_0001>
module attributes {stable_mosaic.version = 11 : i64} {
  func.func @_identity_copy_kernel(%arg0: i32, %arg1: memref<4x128xf32, #tpu.memory_space<vmem>>, %arg2: memref<4x128xf32, #tpu.memory_space<vmem>>) attributes {dimension_semantics = [#tpu.dimension_semantics<parallel>], iteration_bounds = array<i64: 1>, scalar_prefetch = 0 : i64, scratch_operands = 0 : i64, tpu.core_type = #tpu.core_type<tc>, window_params = [{transform_indices = @transform_0, window_bounds = array<i64: 4, 128>}, {transform_indices = @transform_1, window_bounds = array<i64: 4, 128>}]} {
    %c0 = arith.constant 0 : index
    %c0_0 = arith.constant 0 : index
    %0 = vector.load %arg1[%c0, %c0_0] : memref<4x128xf32, #tpu.memory_space<vmem>>, vector<4x128xf32>
    %c0_1 = arith.constant 0 : index
    %c0_2 = arith.constant 0 : index
    %1 = vector.load %arg2[%c0_1, %c0_2] : memref<4x128xf32, #tpu.memory_space<vmem>>, vector<4x128xf32>
    tpu.vector_store %arg2[%c0_1, %c0_2], %0 {strides = array<i32>} : memref<4x128xf32, #tpu.memory_space<vmem>>, vector<4x128xf32>,
    return
  }
  func.func @transform_0(%arg0: i32) -> (i32, i32) {
    %c0_i32 = arith.constant 0 : i32
    %c0_i32_0 = arith.constant 0 : i32
    return %arg0, %c0_i32 : i32, i32
  }
  func.func @transform_1(%arg0: i32) -> (i32, i32) {
    %c0_i32 = arith.constant 0 : i32
    %c0_i32_0 = arith.constant 0 : i32
    return %arg0, %c0_i32 : i32, i32
  }
}

</mosaic_0001>

<llo_original>
// kernel: tpu_custom_call.1
$region0: #{tpu_custom_call.1}
  #allocation0 [shape = 'u32[]', space=smem, size = 0x4, offset = 0x4, fixed_abs, tag = 'smem constant byte address 0x4 - core index']
  #allocation1 [shape = 'u32[72,128]{1,0:T(1,128)}', space=vmem, size = 0x9000, scoped, tag = 'internal scratch']
  %s0 = inlined_call_operand.hbm [shape: f32[4,128], index: 0, kind: input, shape index: {}]
  %s1 = inlined_call_operand.hbm [shape: f32[4,128], index: 1, kind: output, shape index: {}]
  %s2 = sld [smem:[#allocation0]]
  $region18: #{tpu_custom_call.1} parent=0
    _
  %s4 = ssub.s32 1, %s2
  %s5 = scalar_select 0, %s4, %s2
  $region1: #{tpu_custom_call.1} parent=0
    #allocation2 [shape = 'u8[2048]{0}', space=vmem, size = 0x800, scoped, tag = 'input window, operand 0, single buffered']
    #allocation3 [shape = 's32[1]{0}', space=sflag, size = 0x4, scoped, tag = 'scoped memory for tpu_custom_call.1']
    #allocation4 [shape = 's32[1]{0}', space=sflag, size = 0x4, scoped, tag = 'scoped memory for tpu_custom_call.1']
    #allocation5 [shape = 'u8[2048]{0}', space=vmem, size = 0x800, scoped, tag = 'output window, operand 0, single buffered']
    %6 = vsyncpa [#allocation3], 0
    %7 = vsyncpa [#allocation4], 0
    // Predicated region
    $region2: #{tpu_custom_call.1} parent=1 // pred_check
      _
    $region3: #{tpu_custom_call.1} parent=1 // pred_check_branch
      %9 = sbr.rel (0) target = $region5
    $region4: #{tpu_custom_call.1} parent=1 // pred_region
      %11 = vsyncadd [#allocation3], 0
      %s13 = sshll.u32 %s0, 4
      %s14 = int_to_ptr.hbm [resolvable:$true] %s13
      %s15 = sshll.u32 [#allocation2], 4
      %s16 = int_to_ptr.vmem [resolvable:$true] %s15
      %18 = dma.hbm_to_vmem [thread:$0]  %s14, 64, %s16, [#allocation3]
    $region5: #{tpu_custom_call.1} parent=1 // pred_fallthru
      _
    // Predicated region
    $region6: #{tpu_custom_call.1} parent=1 // pred_check
      _
    $region7: #{tpu_custom_call.1} parent=1 // pred_check_branch
      %20 = sbr.rel (0) target = $region9
    $region8: #{tpu_custom_call.1} parent=1 // pred_region
      %22 = dma.done [#allocation3], 64
    $region9: #{tpu_custom_call.1} parent=1 // pred_fallthru
      _
    %v23 = vld [vmem:[#allocation2] sm:$0xf]
    %24 = vst [vmem:[#allocation5] sm:$0xf] %v23
    // Predicated region
    $region10: #{tpu_custom_call.1} parent=1 // pred_check
      _
    $region11: #{tpu_custom_call.1} parent=1 // pred_check_branch
      %26 = sbr.rel (0) target = $region13
    $region12: #{tpu_custom_call.1} parent=1 // pred_region
      %28 = vsyncadd [#allocation4], 0
      %s30 = sshll.u32 [#allocation5], 4
      %s31 = int_to_ptr.vmem [resolvable:$true] %s30
      %s32 = sshll.u32 %s1, 4
      %s33 = int_to_ptr.hbm [resolvable:$true] %s32
      %35 = dma.vmem_to_hbm [thread:$0]  %s31, 64, %s33, [#allocation4]
    $region13: #{tpu_custom_call.1} parent=1 // pred_fallthru
      _
    // Predicated region
    $region14: #{tpu_custom_call.1} parent=1 // pred_check
      _
    $region15: #{tpu_custom_call.1} parent=1 // pred_check_branch
      %37 = sbr.rel (0) target = $region17
    $region16: #{tpu_custom_call.1} parent=1 // pred_region
      %39 = dma.done [#allocation4], 64
    $region17: #{tpu_custom_call.1} parent=1 // pred_fallthru
      _
    %40 = vsyncpa [#allocation3], 1
    %41 = vsyncpa [#allocation4], 1

</llo_original>
